<compile_context>
chip_gen: v7x
topology: tpu7x:2x2x1
jax: 0.10.0
libtpu: 0.0.40
codegen_flags: <defaults>
</compile_context>

<pallas_src>
import jax
import jax.numpy as jnp
from jax.experimental import pallas as pl
from jax.experimental.pallas import tpu as pltpu


def cde_func_kernel(z_ref, w1_ref, b1_ref, w2_ref, b2_ref, o_ref):
    # Fused MLP hot path: matmul -> bias -> relu -> matmul -> bias -> tanh.
    # MXU sees bf16 operands, accumulates in f32; elementwise chain stays f32.
    z = z_ref[...]                                                # (tm, H) f32
    h = jnp.dot(z.astype(w1_ref.dtype), w1_ref[...],
                preferred_element_type=jnp.float32)               # (tm, 128) f32
    h = jnp.maximum(h + b1_ref[...], 0.0)                         # bias + relu (f32)
    y = jnp.dot(h.astype(w2_ref.dtype), w2_ref[...],
                preferred_element_type=jnp.float32)               # (tm, H*C) f32
    y = y + b2_ref[...]
    o_ref[...] = jnp.tanh(y).astype(o_ref.dtype)


def cde_func_forward(z, w1, b1, w2, b2, input_channels, hidden_channels, *,
                     tm=256, matmul_dtype=jnp.bfloat16):
    """z: (batch, hidden_channels) -> (batch, hidden_channels, input_channels).

    w1: (hidden_channels, 128), b1: (128,)
    w2: (128, input_channels * hidden_channels), b2: (input_channels*hidden_channels,)
    (weights stored pre-transposed as (in, out) relative to torch.nn.Linear).
    """
    batch, hidden = z.shape
    assert hidden == hidden_channels
    mid = w1.shape[1]                      # 128
    out_dim = w2.shape[1]                  # input_channels * hidden_channels
    assert out_dim == input_channels * hidden_channels

    # Effective batch tile: big enough to fill the MXU / amortize grid overhead,
    # never bigger than the (8-rounded) batch, always a multiple of 8, capped at
    # 512 to keep the (tm, out_dim) intermediate from becoming pure spill traffic.
    tm_eff = min(min(tm, 512), max(8, pl.cdiv(batch, 8) * 8))
    tm_eff = max(8, (tm_eff // 8) * 8)

    padded_batch = pl.cdiv(batch, tm_eff) * tm_eff
    if padded_batch != batch:
        z = jnp.pad(z, ((0, padded_batch - batch), (0, 0)))

    # bf16 operands for the MXU; biases stay f32 (added to the f32 accumulator).
    w1_c = w1.astype(matmul_dtype)
    w2_c = w2.astype(matmul_dtype)
    b1_2d = b1.reshape(1, mid).astype(jnp.float32)
    b2_2d = b2.reshape(1, out_dim).astype(jnp.float32)

    grid = (padded_batch // tm_eff,)

    flat = pl.pallas_call(
        cde_func_kernel,
        out_shape=jax.ShapeDtypeStruct((padded_batch, out_dim), z.dtype),
        grid_spec=pl.GridSpec(
            grid=grid,
            in_specs=[
                pl.BlockSpec((tm_eff, hidden), lambda i: (i, 0)),   # z tile
                pl.BlockSpec((hidden, mid), lambda i: (0, 0)),      # W1 (resident)
                pl.BlockSpec((1, mid), lambda i: (0, 0)),           # b1 (resident)
                pl.BlockSpec((mid, out_dim), lambda i: (0, 0)),     # W2 (resident)
                pl.BlockSpec((1, out_dim), lambda i: (0, 0)),       # b2 (resident)
            ],
            out_specs=pl.BlockSpec((tm_eff, out_dim), lambda i: (i, 0)),
        ),
        compiler_params=pltpu.CompilerParams(
            dimension_semantics=("parallel",),   # splits across TCs on v7x
        ),
    )(z, w1_c, b1_2d, w2_c, b2_2d)

    if padded_batch != batch:
        flat = flat[:batch]

    # Same as torch .view(*shape[:-1], hidden_channels, input_channels).
    # Kept outside the kernel so the kernel store stays lane-dense (last dim 128).
    return flat.reshape(batch, hidden_channels, input_channels)


if __name__ == "__main__":
    input_channels = 4
    hidden_channels = 32
    mid = 128
    batch = 16   # small demo batch; tile auto-clamps to 16 (multiple of 8)

    key = jax.random.PRNGKey(0)
    k_z, k_w1, k_b1, k_w2, k_b2 = jax.random.split(key, 5)

    # Deterministic synthetic parameters (torch.nn.Linear shapes, stored (in, out)).
    z = jax.random.normal(k_z, (batch, hidden_channels), dtype=jnp.float32)
    w1 = jax.random.normal(k_w1, (hidden_channels, mid), dtype=jnp.float32) * 0.1
    b1 = jax.random.normal(k_b1, (mid,), dtype=jnp.float32) * 0.1
    w2 = jax.random.normal(
        k_w2, (mid, input_channels * hidden_channels), dtype=jnp.float32) * 0.1
    b2 = jax.random.normal(
        k_b2, (input_channels * hidden_channels,), dtype=jnp.float32) * 0.1

    out = cde_func_forward(z, w1, b1, w2, b2, input_channels, hidden_channels)
    out = jax.block_until_ready(out)
    assert out.shape == (batch, hidden_channels, input_channels)

    # Tight check vs a reference that uses the same bf16-operand / f32-accum matmuls.
    bf16 = jnp.bfloat16
    ref_h = jnp.maximum(
        jnp.dot(z.astype(bf16), w1.astype(bf16),
                preferred_element_type=jnp.float32) + b1, 0.0)
    ref_bf16 = jnp.tanh(
        jnp.dot(ref_h.astype(bf16), w2.astype(bf16),
                preferred_element_type=jnp.float32) + b2
    ).reshape(batch, hidden_channels, input_channels)
    assert jnp.allclose(out, ref_bf16, atol=1e-5, rtol=1e-5)

    # Loose check vs the exact f32 torch semantics (bf16 matmul rounding only).
    ref_f32 = jnp.tanh(jnp.maximum(z @ w1 + b1, 0.0) @ w2 + b2).reshape(
        batch, hidden_channels, input_channels)
    assert jnp.allclose(out, ref_f32, atol=3e-2, rtol=3e-2)

    print("KERNEL_OK")
</pallas_src>

<mosaic_0001>
module attributes {stable_mosaic.version = 11 : i64} {
  func.func @cde_func_kernel(%arg0: i32, %arg1: memref<16x32xf32, #tpu.memory_space<vmem>>, %arg2: memref<32x128xbf16, #tpu.memory_space<vmem>>, %arg3: memref<1x128xf32, #tpu.memory_space<vmem>>, %arg4: memref<128x128xbf16, #tpu.memory_space<vmem>>, %arg5: memref<1x128xf32, #tpu.memory_space<vmem>>, %arg6: memref<16x128xf32, #tpu.memory_space<vmem>>) attributes {dimension_semantics = [#tpu.dimension_semantics<parallel>], iteration_bounds = array<i64: 1>, scalar_prefetch = 0 : i64, scratch_operands = 0 : i64, tpu.core_type = #tpu.core_type<tc>, window_params = [{transform_indices = @transform_0, window_bounds = array<i64: 16, 32>}, {pipeline_mode = #tpu.pipeline_mode<synchronous>, transform_indices = @transform_1, window_bounds = array<i64: 32, 128>}, {pipeline_mode = #tpu.pipeline_mode<synchronous>, transform_indices = @transform_2, window_bounds = array<i64: 1, 128>}, {pipeline_mode = #tpu.pipeline_mode<synchronous>, transform_indices = @transform_3, window_bounds = array<i64: 128, 128>}, {pipeline_mode = #tpu.pipeline_mode<synchronous>, transform_indices = @transform_4, window_bounds = array<i64: 1, 128>}, {transform_indices = @transform_5, window_bounds = array<i64: 16, 128>}]} {
    %c0 = arith.constant 0 : index
    %c0_0 = arith.constant 0 : index
    %0 = vector.load %arg1[%c0, %c0_0] : memref<16x32xf32, #tpu.memory_space<vmem>>, vector<16x32xf32>
    %1 = arith.truncf %0 : vector<16x32xf32> to vector<16x32xbf16>
    %c0_1 = arith.constant 0 : index
    %c0_2 = arith.constant 0 : index
    %2 = vector.load %arg2[%c0_1, %c0_2] : memref<32x128xbf16, #tpu.memory_space<vmem>>, vector<32x128xbf16>
    %cst = arith.constant dense<0.000000e+00> : vector<16x128xf32>
    %3 = tpu.matmul %1, %2, %cst {dimension_numbers = #tpu.dot_dimension_numbers<[1], [0], [0], [1], [0, 0, 1, 1], [], []>} : vector<16x32xbf16>, vector<32x128xbf16>, vector<16x128xf32> -> vector<16x128xf32>
    %c0_3 = arith.constant 0 : index
    %c0_4 = arith.constant 0 : index
    %4 = vector.load %arg3[%c0_3, %c0_4] : memref<1x128xf32, #tpu.memory_space<vmem>>, vector<1x128xf32>
    %5 = vector.broadcast %4 : vector<1x128xf32> to vector<16x128xf32>
    %6 = arith.addf %3, %5 : vector<16x128xf32>
    %cst_5 = arith.constant 0.000000e+00 : f32
    %7 = vector.broadcast %cst_5 : f32 to vector<16x128xf32>
    %8 = arith.maximumf %6, %7 : vector<16x128xf32>
    %9 = arith.truncf %8 : vector<16x128xf32> to vector<16x128xbf16>
    %c0_6 = arith.constant 0 : index
    %c0_7 = arith.constant 0 : index
    %10 = vector.load %arg4[%c0_6, %c0_7] : memref<128x128xbf16, #tpu.memory_space<vmem>>, vector<128x128xbf16>
    %cst_8 = arith.constant dense<0.000000e+00> : vector<16x128xf32>
    %11 = tpu.matmul %9, %10, %cst_8 {dimension_numbers = #tpu.dot_dimension_numbers<[1], [0], [0], [1], [0, 0, 1, 1], [], []>} : vector<16x128xbf16>, vector<128x128xbf16>, vector<16x128xf32> -> vector<16x128xf32>
    %c0_9 = arith.constant 0 : index
    %c0_10 = arith.constant 0 : index
    %12 = vector.load %arg5[%c0_9, %c0_10] : memref<1x128xf32, #tpu.memory_space<vmem>>, vector<1x128xf32>
    %13 = vector.broadcast %12 : vector<1x128xf32> to vector<16x128xf32>
    %14 = arith.addf %11, %13 : vector<16x128xf32>
    %15 = math.tanh %14 : vector<16x128xf32>
    %c0_11 = arith.constant 0 : index
    %c0_12 = arith.constant 0 : index
    %16 = vector.load %arg6[%c0_11, %c0_12] : memref<16x128xf32, #tpu.memory_space<vmem>>, vector<16x128xf32>
    tpu.vector_store %arg6[%c0_11, %c0_12], %15 {strides = array<i32>} : memref<16x128xf32, #tpu.memory_space<vmem>>, vector<16x128xf32>,
    return
  }
  func.func @transform_0(%arg0: i32) -> (i32, i32) {
    %c0_i32 = arith.constant 0 : i32
    %c0_i32_0 = arith.constant 0 : i32
    return %arg0, %c0_i32 : i32, i32
  }
  func.func @transform_1(%arg0: i32) -> (i32, i32) {
    %c0_i32 = arith.constant 0 : i32
    %c0_i32_0 = arith.constant 0 : i32
    %c0_i32_1 = arith.constant 0 : i32
    return %c0_i32, %c0_i32_0 : i32, i32
  }
  func.func @transform_2(%arg0: i32) -> (i32, i32) {
    %c0_i32 = arith.constant 0 : i32
    %c0_i32_0 = arith.constant 0 : i32
    %c0_i32_1 = arith.constant 0 : i32
    return %c0_i32, %c0_i32_0 : i32, i32
  }
  func.func @transform_3(%arg0: i32) -> (i32, i32) {
    %c0_i32 = arith.constant 0 : i32
    %c0_i32_0 = arith.constant 0 : i32
    %c0_i32_1 = arith.constant 0 : i32
    return %c0_i32, %c0_i32_0 : i32, i32
  }
  func.func @transform_4(%arg0: i32) -> (i32, i32) {
    %c0_i32 = arith.constant 0 : i32
    %c0_i32_0 = arith.constant 0 : i32
    %c0_i32_1 = arith.constant 0 : i32
    return %c0_i32, %c0_i32_0 : i32, i32
  }
  func.func @transform_5(%arg0: i32) -> (i32, i32) {
    %c0_i32 = arith.constant 0 : i32
    %c0_i32_0 = arith.constant 0 : i32
    return %arg0, %c0_i32 : i32, i32
  }
}

</mosaic_0001>

<llo_original>
// kernel: tpu_custom_call.1
$region0: #{tpu_custom_call.1}
  #allocation0 [shape = 'u32[]', space=smem, size = 0x4, offset = 0x4, fixed_abs, tag = 'smem constant byte address 0x4 - core index']
  #allocation1 [shape = 'u32[144,128]{1,0:T(1,128)}', space=vmem, size = 0x12000, scoped, tag = 'internal scratch']
  %s0 = inlined_call_operand.hbm [shape: f32[16,32], index: 0, kind: input, shape index: {}]
  %s1 = inlined_call_operand.hbm [shape: bf16[32,128], index: 1, kind: input, shape index: {}]
  %s2 = inlined_call_operand.vmem [shape: f32[1,128], index: 2, kind: input, shape index: {}]
  %s3 = inlined_call_operand.hbm [shape: bf16[128,128], index: 3, kind: input, shape index: {}]
  %s4 = inlined_call_operand.vmem [shape: f32[1,128], index: 4, kind: input, shape index: {}]
  %s5 = inlined_call_operand.hbm [shape: f32[16,128], index: 5, kind: output, shape index: {}]
  %s6 = sld [smem:[#allocation0]]
  $region42: #{tpu_custom_call.1} parent=0
    _
  %s8 = ssub.s32 1, %s6
  %s9 = scalar_select 0, %s8, %s6
  $region1: #{tpu_custom_call.1} parent=0
    #allocation2 [shape = 'u8[8192]{0}', space=vmem, size = 0x2000, scoped, tag = 'input window, operand 0, single buffered']
    #allocation3 [shape = 's32[1]{0}', space=sflag, size = 0x4, scoped, tag = 'scoped memory for tpu_custom_call.1']
    #allocation4 [shape = 's32[1]{0}', space=sflag, size = 0x4, scoped, tag = 'scoped memory for tpu_custom_call.1']
    #allocation5 [shape = 'u8[8192]{0}', space=vmem, size = 0x2000, scoped, tag = 'input window, operand 1, single buffered']
    #allocation6 [shape = 's32[1]{0}', space=sflag, size = 0x4, scoped, tag = 'scoped memory for tpu_custom_call.1']
    #allocation7 [shape = 'u8[32768]{0}', space=vmem, size = 0x8000, scoped, tag = 'input window, operand 3, single buffered']
    #allocation8 [shape = 'u8[8192]{0}', space=vmem, size = 0x2000, scoped, tag = 'output window, operand 0, single buffered']
    %10 = vsyncpa [#allocation3], 0
    %11 = vsyncpa [#allocation6], 0
    %12 = vsyncpa [#allocation4], 0
    // Predicated region
    $region2: #{tpu_custom_call.1} parent=1 // pred_check
      _
    $region3: #{tpu_custom_call.1} parent=1 // pred_check_branch
      %14 = sbr.rel (0) target = $region5
    $region4: #{tpu_custom_call.1} parent=1 // pred_region
      %s16 = ssub.s32 256, 256
      %17 = vsyncadd [#allocation3], %s16
      %s18 = sshll.u32 [#allocation2], 4
      %s19 = int_to_ptr.vmem [resolvable:$true] %s18
      %24 = dma.hbm_to_vmem [thread:$0]  %s0, 256, %s19, [#allocation3], 128, 128, 8
    $region5: #{tpu_custom_call.1} parent=1 // pred_fallthru
      _
    // Predicated region
    $region6: #{tpu_custom_call.1} parent=1 // pred_check
      _
    $region7: #{tpu_custom_call.1} parent=1 // pred_check_branch
      %26 = sbr.rel (0) target = $region9
    $region8: #{tpu_custom_call.1} parent=1 // pred_region
      %s28 = ssub.s32 256, 256
      %29 = vsyncadd [#allocation6], %s28
      %s30 = sshll.u32 [#allocation5], 4
      %s31 = int_to_ptr.vmem [resolvable:$true] %s30
      %36 = dma.hbm_to_vmem [thread:$0]  %s1, 256, %s31, [#allocation6], 64, 64, 4
    $region9: #{tpu_custom_call.1} parent=1 // pred_fallthru
      _
    // Predicated region
    $region10: #{tpu_custom_call.1} parent=1 // pred_check
      _
    $region11: #{tpu_custom_call.1} parent=1 // pred_check_branch
      %38 = sbr.rel (0) target = $region13
    $region12: #{tpu_custom_call.1} parent=1 // pred_region
      _
    $region13: #{tpu_custom_call.1} parent=1 // pred_fallthru
      _
    // Predicated region
    $region14: #{tpu_custom_call.1} parent=1 // pred_check
      _
    $region15: #{tpu_custom_call.1} parent=1 // pred_check_branch
      %40 = sbr.rel (0) target = $region17
    $region16: #{tpu_custom_call.1} parent=1 // pred_region
      %s42 = ssub.s32 1024, 1024
      %43 = vsyncadd [#allocation6], %s42
      %s44 = sshll.u32 [#allocation7], 4
      %s45 = int_to_ptr.vmem [resolvable:$true] %s44
      %50 = dma.hbm_to_vmem [thread:$0]  %s3, 1024, %s45, [#allocation6], 64, 64, 4
    $region17: #{tpu_custom_call.1} parent=1 // pred_fallthru
      _
    // Predicated region
    $region18: #{tpu_custom_call.1} parent=1 // pred_check
      _
    $region19: #{tpu_custom_call.1} parent=1 // pred_check_branch
      %52 = sbr.rel (0) target = $region21
    $region20: #{tpu_custom_call.1} parent=1 // pred_region
      _
    $region21: #{tpu_custom_call.1} parent=1 // pred_fallthru
      _
    // Predicated region
    $region22: #{tpu_custom_call.1} parent=1 // pred_check
      _
    $region23: #{tpu_custom_call.1} parent=1 // pred_check_branch
      %54 = sbr.rel (0) target = $region25
    $region24: #{tpu_custom_call.1} parent=1 // pred_region
      %55 = dma.done [#allocation3], 256
    $region25: #{tpu_custom_call.1} parent=1 // pred_fallthru
      _
    // Predicated region
    $region26: #{tpu_custom_call.1} parent=1 // pred_check
      _
    $region27: #{tpu_custom_call.1} parent=1 // pred_check_branch
      %57 = sbr.rel (0) target = $region29
    $region28: #{tpu_custom_call.1} parent=1 // pred_region
      %58 = dma.done [#allocation6], 256
    $region29: #{tpu_custom_call.1} parent=1 // pred_fallthru
      _
    // Predicated region
    $region30: #{tpu_custom_call.1} parent=1 // pred_check
      _
    $region31: #{tpu_custom_call.1} parent=1 // pred_check_branch
      %60 = sbr.rel (0) target = $region33
    $region32: #{tpu_custom_call.1} parent=1 // pred_region
      %61 = dma.done [#allocation6], 1024
    $region33: #{tpu_custom_call.1} parent=1 // pred_fallthru
      _
    %v63 = vld [vmem:[#allocation2] sm:$0xff]
    %v64 = vld [vmem:[#allocation2 + $0x8] sm:$0xff]
    %v65 = vpack.c.bf16 %v64, %v63
    %v66 = vld [vmem:[#allocation5] sm:$0xf]
    %v67 = vld [vmem:[#allocation5 + $0x4] sm:$0xf]
    %v68 = vld [vmem:[#allocation5 + $0x8] sm:$0xf]
    %v69 = vld [vmem:[#allocation5 + $0xc] sm:$0xf]
    %v70 = vld [vmem:[%s2] sm:$0x1]
    %v72 = vlaneseq
    %v73 = vshrl.u32 %v72, 7
    %v74 = vsub.s32 0, %v73
    %v75 = vrot.slane %v70, %v74
    %v81 = vunpack.c.l.b16 %v66
    %v82 = vunpack.c.l.b16 %v67
    %v83 = vunpack.c.l.b16 %v68
    %v84 = vunpack.c.l.b16 %v69
    %v85 = vpack.c.b16 %v82, %v81
    %v86 = vpack.c.b16 %v84, %v83
    %vm89 = vcmask 261120
    %v91 = vsel %vm89, %v65, 0
    %93 = vmatprep.subr.bf16.mxu0 0
    %94 = vmatpush1.bf16.msra.mxu0 %v85
    %95 = vmatprep.subr.bf16.mxu0 0
    %96 = vmatpush1.bf16.msra.mxu0 %v86
    %97 = vmatprep.subr.bf16.mxu0 0
    %98 = vmatpush1.bf16.msra.mxu0 0
    %99 = vmatprep.subr.bf16.mxu0 0
    %100 = vmatpush1.bf16.msra.mxu0 0
    %101 = vmatprep.subr.bf16.mxu0 0
    %102 = vmatpush1.bf16.msra.mxu0 0
    %103 = vmatprep.subr.bf16.mxu0 0
    %104 = vmatpush1.bf16.msra.mxu0 0
    %105 = vmatprep.subr.bf16.mxu0 0
    %106 = vmatpush1.bf16.msra.mxu0 0
    %107 = vmatprep.subr.bf16.mxu0 0
    %108 = vmatpush1.bf16.msra.mxu0 0
    %109 = vmatprep.subr.bf16.mxu0 0
    %110 = vmatpush1.bf16.msra.mxu0 0
    %111 = vmatprep.subr.bf16.mxu0 0
    %112 = vmatpush1.bf16.msra.mxu0 0
    %113 = vmatprep.subr.bf16.mxu0 0
    %114 = vmatpush1.bf16.msra.mxu0 0
    %115 = vmatprep.subr.bf16.mxu0 0
    %116 = vmatpush1.bf16.msra.mxu0 0
    %117 = vmatprep.subr.bf16.mxu0 0
    %118 = vmatpush1.bf16.msra.mxu0 0
    %119 = vmatprep.subr.bf16.mxu0 0
    %120 = vmatpush1.bf16.msra.mxu0 0
    %121 = vmatprep.subr.bf16.mxu0 0
    %122 = vmatpush1.bf16.msra.mxu0 0
    %123 = vmatprep.subr.bf16.mxu0 0
    %124 = vmatpush1.bf16.msra.mxu0 0
    %125 = vmatprep.mubr.bf16.mxu0 0
    %126 = vmatmul.mubr.bf16.gmra.mrb[0].mxu0 %v91
    %v127 = vpop.f32.mrb[0].mxu0
    %v128 = vadd.f32 %v75, %v127
    %v129 = vpop.f32.mrb[0].mxu0
    %v130 = vpop.f32.mrb[0].mxu0
    %v131 = vadd.f32 %v75, %v130
    %v132 = vpop.f32.mrb[0].mxu0
    %133 = vdwg.mxu0
    %v134 = vmax.f32 %v128, 0.0
    %v135 = vmax.f32 %v131, 0.0
    %v136 = vpack.c.bf16 %v135, %v134
    %v137 = vld [vmem:[#allocation7] sm:$0xf]
    %v138 = vld [vmem:[#allocation7 + $0x4] sm:$0xf]
    %v139 = vld [vmem:[#allocation7 + $0x8] sm:$0xf]
    %v140 = vld [vmem:[#allocation7 + $0xc] sm:$0xf]
    %v141 = vld [vmem:[#allocation7 + $0x10] sm:$0xf]
    %v142 = vld [vmem:[#allocation7 + $0x14] sm:$0xf]
    %v143 = vld [vmem:[#allocation7 + $0x18] sm:$0xf]
    %v144 = vld [vmem:[#allocation7 + $0x1c] sm:$0xf]
    %v145 = vld [vmem:[#allocation7 + $0x20] sm:$0xf]
    %v146 = vld [vmem:[#allocation7 + $0x24] sm:$0xf]
    %v147 = vld [vmem:[#allocation7 + $0x28] sm:$0xf]
    %v148 = vld [vmem:[#allocation7 + $0x2c] sm:$0xf]
    %v149 = vld [vmem:[#allocation7 + $0x30] sm:$0xf]
    %v150 = vld [vmem:[#allocation7 + $0x34] sm:$0xf]
    %v151 = vld [vmem:[#allocation7 + $0x38] sm:$0xf]
    %v152 = vld [vmem:[#allocation7 + $0x3c] sm:$0xf]
    %v153 = vld [vmem:[%s4] sm:$0x1]
    %v155 = vlaneseq
    %v156 = vshrl.u32 %v155, 7
    %v157 = vsub.s32 0, %v156
    %v158 = vrot.slane %v153, %v157
    %v176 = vunpack.c.l.b16 %v137
    %v177 = vunpack.c.l.b16 %v138
    %v178 = vunpack.c.l.b16 %v139
    %v179 = vunpack.c.l.b16 %v140
    %v180 = vunpack.c.l.b16 %v141
    %v181 = vunpack.c.l.b16 %v142
    %v182 = vunpack.c.l.b16 %v143
    %v183 = vunpack.c.l.b16 %v144
    %v184 = vunpack.c.l.b16 %v145
    %v185 = vunpack.c.l.b16 %v146
    %v186 = vunpack.c.l.b16 %v147
    %v187 = vunpack.c.l.b16 %v148
    %v188 = vunpack.c.l.b16 %v149
    %v189 = vunpack.c.l.b16 %v150
    %v190 = vunpack.c.l.b16 %v151
    %v191 = vunpack.c.l.b16 %v152
    %v192 = vpack.c.b16 %v177, %v176
    %v193 = vpack.c.b16 %v179, %v178
    %v194 = vpack.c.b16 %v181, %v180
    %v195 = vpack.c.b16 %v183, %v182
    %v196 = vpack.c.b16 %v185, %v184
    %v197 = vpack.c.b16 %v187, %v186
    %v198 = vpack.c.b16 %v189, %v188
    %v199 = vpack.c.b16 %v191, %v190
    %208 = vmatprep.subr.bf16.mxu0 0
    %209 = vmatpush1.bf16.msra.mxu0 %v192
    %210 = vmatprep.subr.bf16.mxu0 0
    %211 = vmatpush1.bf16.msra.mxu0 %v193
    %212 = vmatprep.subr.bf16.mxu0 0
    %213 = vmatpush1.bf16.msra.mxu0 %v194
    %214 = vmatprep.subr.bf16.mxu0 0
    %215 = vmatpush1.bf16.msra.mxu0 %v195
    %216 = vmatprep.subr.bf16.mxu0 0
    %217 = vmatpush1.bf16.msra.mxu0 %v196
    %218 = vmatprep.subr.bf16.mxu0 0
    %219 = vmatpush1.bf16.msra.mxu0 %v197
    %220 = vmatprep.subr.bf16.mxu0 0
    %221 = vmatpush1.bf16.msra.mxu0 %v198
    %222 = vmatprep.subr.bf16.mxu0 0
    %223 = vmatpush1.bf16.msra.mxu0 %v199
    %224 = vmatprep.subr.bf16.mxu0 0
    %225 = vmatpush1.bf16.msra.mxu0 0
    %226 = vmatprep.subr.bf16.mxu0 0
    %227 = vmatpush1.bf16.msra.mxu0 0
    %228 = vmatprep.subr.bf16.mxu0 0
    %229 = vmatpush1.bf16.msra.mxu0 0
    %230 = vmatprep.subr.bf16.mxu0 0
    %231 = vmatpush1.bf16.msra.mxu0 0
    %232 = vmatprep.subr.bf16.mxu0 0
    %233 = vmatpush1.bf16.msra.mxu0 0
    %234 = vmatprep.subr.bf16.mxu0 0
    %235 = vmatpush1.bf16.msra.mxu0 0
    %236 = vmatprep.subr.bf16.mxu0 0
    %237 = vmatpush1.bf16.msra.mxu0 0
    %238 = vmatprep.subr.bf16.mxu0 0
    %239 = vmatpush1.bf16.msra.mxu0 0
    %240 = vmatprep.mubr.bf16.mxu0 0
    %241 = vmatmul.mubr.bf16.gmra.mrb[0].mxu0 %v136
    %v242 = vpop.f32.mrb[0].mxu0
    %v243 = vadd.f32 %v158, %v242
    %v244 = vpop.f32.mrb[0].mxu0
    %v245 = vpop.f32.mrb[0].mxu0
    %v246 = vadd.f32 %v158, %v245
    %v247 = vpop.f32.mrb[0].mxu0
    %248 = vdwg.mxu0
    %v249 = vtanh.pop %v243
    %v250 = vtanh.pop %v246
    %251 = vst [vmem:[#allocation8] sm:$0xff] %v249
    %252 = vst [vmem:[#allocation8 + $0x8] sm:$0xff] %v250
    // Predicated region
    $region34: #{tpu_custom_call.1} parent=1 // pred_check
      _
    $region35: #{tpu_custom_call.1} parent=1 // pred_check_branch
      %254 = sbr.rel (0) target = $region37
    $region36: #{tpu_custom_call.1} parent=1 // pred_region
      %s256 = ssub.s32 256, 256
      %257 = vsyncadd [#allocation4], %s256
      %s258 = sshll.u32 [#allocation8], 4
      %s259 = int_to_ptr.vmem [resolvable:$true] %s258
      %264 = dma.vmem_to_hbm [thread:$0]  %s259, 256, %s5, [#allocation4], 128, 128, 8
    $region37: #{tpu_custom_call.1} parent=1 // pred_fallthru
      _
    // Predicated region
    $region38: #{tpu_custom_call.1} parent=1 // pred_check
      _
    $region39: #{tpu_custom_call.1} parent=1 // pred_check_branch
      %266 = sbr.rel (0) target = $region41
    $region40: #{tpu_custom_call.1} parent=1 // pred_region
      %267 = dma.done [#allocation4], 256
    $region41: #{tpu_custom_call.1} parent=1 // pred_fallthru
      _
    %268 = vsyncpa [#allocation3], 1
    %269 = vsyncpa [#allocation6], 1
    %270 = vsyncpa [#allocation4], 1

</llo_original>
